<compile_context>
chip_gen: v6e
topology: v6e:2x2x1
jax: 0.10.0
libtpu: 0.0.40
codegen_flags: <defaults>
</compile_context>

<pallas_src>
import functools

import jax
import jax.numpy as jnp
from jax.experimental import pallas as pl
from jax.experimental.pallas import tpu as pltpu


def _round_up(x, m):
    return ((x + m - 1) // m) * m


def _vmem_caps():
    """(physical_vmem_bytes, usable_budget_bytes) - generation aware."""
    cap = 64 << 20                               # conservative default (v7x per-TC)
    try:
        info = pltpu.get_tpu_info()
        cap = int(getattr(info, "vmem_capacity_bytes", cap)) or cap
    except Exception:
        pass
    budget = max(cap - (16 << 20), 32 << 20)     # leave headroom for Mosaic scratch
    return cap, budget


def _choose_batch_tile(B, per_row_bytes, fixed_bytes, budget, sublane, requested):
    if requested is None:
        avail = max(budget - fixed_bytes, per_row_bytes * sublane)
        tb = avail // max(per_row_bytes, 1)
        tb = min(tb, 2048)                 # diminishing returns past ~2K rows/step
        # Keep >= ~8 grid steps so v7x's 2 TCs both get work and the BlockSpec
        # pipeline has depth (on v5e/v6e this still leaves >=512-row tiles for
        # large B, which is at the HBM roofline already).
        tb = min(tb, max(pl.cdiv(B, 8), 1))
    else:
        tb = requested
    tb = max(sublane, _round_up(min(tb, B), sublane))
    return int(tb)


# ----------------------------- kernels --------------------------------------


def _mlp_kernel(x_ref, w1_ref, b1_ref, w2_ref, b2_ref, o_ref):
    """relu(relu(x @ W1 + b1) @ W2 + b2) with W1/W2 fully VMEM-resident."""
    h = jnp.dot(x_ref[...], w1_ref[...], preferred_element_type=jnp.float32)
    h = jnp.maximum(h + b1_ref[...], 0.0)
    y = jnp.dot(h.astype(w2_ref.dtype), w2_ref[...],
                preferred_element_type=jnp.float32)
    y = jnp.maximum(y + b2_ref[...], 0.0)
    o_ref[...] = y.astype(o_ref.dtype)


def _mlp_ksplit_kernel(x_ref, w1_ref, b1_ref, w2_ref, b2_ref, o_ref, acc_ref,
                       *, d_in, tk):
    """Same MLP, but layer 1 is reduced over D_in tiles (grid axis 1)."""
    k = pl.program_id(1)

    @pl.when(k == 0)
    def _():
        acc_ref[...] = jnp.zeros_like(acc_ref)

    x = x_ref[...]
    w1 = w1_ref[...]
    if d_in % tk != 0:
        # The last K block reads past d_in (undefined values); zero both
        # operands so the OOB contribution to the accumulator is exactly 0.
        base = k * tk
        col_ok = (base + jax.lax.broadcasted_iota(jnp.int32, (1, tk), 1)) < d_in
        row_ok = (base + jax.lax.broadcasted_iota(jnp.int32, (tk, 1), 0)) < d_in
        x = jnp.where(col_ok, x, jnp.zeros_like(x))
        w1 = jnp.where(row_ok, w1, jnp.zeros_like(w1))

    acc_ref[...] += jnp.dot(x, w1, preferred_element_type=jnp.float32)

    @pl.when(k == pl.num_programs(1) - 1)
    def _():
        h = jnp.maximum(acc_ref[...] + b1_ref[...], 0.0)
        y = jnp.dot(h.astype(w2_ref.dtype), w2_ref[...],
                    preferred_element_type=jnp.float32)
        o_ref[...] = jnp.maximum(y + b2_ref[...], 0.0).astype(o_ref.dtype)


# ----------------------------- wrapper ---------------------------------------


def sample_learning_forward(feat, w1, b1, w2, b2, *, batch_tile=None,
                            d_in_tile=None):
    """Fused 2-layer MLP: relu(relu(feat @ w1 + b1) @ w2 + b2).

    feat: (B, D_in)   w1: (D_in, D1)   b1: (D1,) or (1, D1)
    w2:   (D1, D2)    b2: (D2,) or (1, D2)                -> (B, D2)
    Weights are stored transposed vs. torch.nn.Linear (i.e. (in, out)).
    """
    B, d_in = feat.shape
    d1 = w1.shape[1]
    d2 = w2.shape[1]
    b1 = b1.reshape(1, d1)
    b2 = b2.reshape(1, d2)
    dtype = feat.dtype

    x_item = feat.dtype.itemsize
    w_item = w1.dtype.itemsize
    o_item = jnp.dtype(dtype).itemsize
    sublane = max(8, 32 // min(x_item, o_item))      # (8,128) f32 / (16,128) bf16

    cap, budget = _vmem_caps()

    w1_bytes = d_in * d1 * w_item
    w2_bytes = d1 * d2 * w_item
    b_bytes = b1.size * b1.dtype.itemsize + b2.size * b2.dtype.itemsize

    # K-split over D_in when a (double-buffered) resident W1 would eat too much
    # VMEM (matters for large num_omics*num_genes, especially on v7x's 64 MiB).
    use_ksplit = (d_in_tile is not None) or (2 * w1_bytes > budget // 2)

    flops = 2 * B * (d_in * d1 + d1 * d2)
    bytes_accessed = int(feat.size * x_item + w1_bytes + w2_bytes + b_bytes
                         + B * d2 * o_item)
    cost = pl.CostEstimate(flops=flops, transcendentals=0,
                           bytes_accessed=bytes_accessed)

    if not use_ksplit:
        # ---- resident-weights path (single grid axis over batch) ----
        fixed = 2 * (w1_bytes + w2_bytes + b_bytes)          # default 2x buffering
        per_row = 2 * d_in * x_item + 2 * d2 * o_item + (d1 + d2) * 4
        tb = _choose_batch_tile(B, per_row, fixed, budget, sublane, batch_tile)
        needed = fixed + tb * per_row
        vmem_limit = int(min(max(needed + (8 << 20), 32 << 20), cap))

        grid_spec = pltpu.PrefetchScalarGridSpec(
            num_scalar_prefetch=0,
            grid=(pl.cdiv(B, tb),),
            in_specs=[
                pl.BlockSpec((tb, d_in), lambda i: (i, 0)),   # batch-tiled input
                pl.BlockSpec((d_in, d1), lambda i: (0, 0)),   # W1 (resident)
                pl.BlockSpec((1, d1), lambda i: (0, 0)),      # b1
                pl.BlockSpec((d1, d2), lambda i: (0, 0)),     # W2
                pl.BlockSpec((1, d2), lambda i: (0, 0)),      # b2
            ],
            out_specs=pl.BlockSpec((tb, d2), lambda i: (i, 0)),
        )
        return pl.pallas_call(
            _mlp_kernel,
            out_shape=jax.ShapeDtypeStruct((B, d2), dtype),
            grid_spec=grid_spec,
            compiler_params=pltpu.CompilerParams(
                dimension_semantics=("parallel",),
                vmem_limit_bytes=vmem_limit),
            cost_estimate=cost,
        )(feat, w1, b1, w2, b2)

    # ---- K-split path: grid = (batch tiles, D_in tiles), f32 accumulator ----
    tk = d_in_tile if d_in_tile is not None else 512
    tk = int(min(_round_up(tk, 128), _round_up(d_in, 128)))

    fixed = 2 * (w2_bytes + b_bytes) + 2 * tk * d1 * w_item   # W1 K-tiles dbl-buffered
    per_row = 2 * tk * x_item + 2 * d2 * o_item + d1 * 4 + d2 * 4
    tb = _choose_batch_tile(B, per_row, fixed, budget, sublane, batch_tile)
    needed = fixed + tb * per_row
    vmem_limit = int(min(max(needed + (8 << 20), 32 << 20), cap))

    grid_spec = pltpu.PrefetchScalarGridSpec(
        num_scalar_prefetch=0,
        grid=(pl.cdiv(B, tb), pl.cdiv(d_in, tk)),
        in_specs=[
            pl.BlockSpec((tb, tk), lambda i, k: (i, k)),      # x tile
            pl.BlockSpec((tk, d1), lambda i, k: (k, 0)),      # W1 K-tile (streamed)
            pl.BlockSpec((1, d1), lambda i, k: (0, 0)),       # b1
            pl.BlockSpec((d1, d2), lambda i, k: (0, 0)),      # W2 (resident)
            pl.BlockSpec((1, d2), lambda i, k: (0, 0)),       # b2
        ],
        out_specs=pl.BlockSpec((tb, d2), lambda i, k: (i, 0)),
        scratch_shapes=[pltpu.VMEM((tb, d1), jnp.float32)],
    )
    return pl.pallas_call(
        functools.partial(_mlp_ksplit_kernel, d_in=d_in, tk=tk),
        out_shape=jax.ShapeDtypeStruct((B, d2), dtype),
        grid_spec=grid_spec,
        compiler_params=pltpu.CompilerParams(
            dimension_semantics=("parallel", "arbitrary"),
            vmem_limit_bytes=vmem_limit),
        cost_estimate=cost,
    )(feat, w1, b1, w2, b2)


def reference_forward(feat, w1, b1, w2, b2):
    h = jnp.maximum(
        jnp.dot(feat, w1, preferred_element_type=jnp.float32)
        + b1.reshape(1, -1), 0.0)
    y = jnp.maximum(
        jnp.dot(h.astype(w2.dtype), w2, preferred_element_type=jnp.float32)
        + b2.reshape(1, -1), 0.0)
    return y.astype(feat.dtype)


if __name__ == "__main__":
    # Small, module-consistent shapes.
    num_omics, num_genes = 4, 64          # D_in = num_omics * num_genes = 256
    slm_dim_1, slm_dim_2 = 64, 32
    batch = 20                            # ragged: exercises the partial last block
    d_in = num_omics * num_genes

    key = jax.random.PRNGKey(0)
    k_x, k_w1, k_b1, k_w2, k_b2 = jax.random.split(key, 5)

    feat = jax.random.normal(k_x, (batch, d_in), dtype=jnp.float32)
    w1 = jax.random.normal(k_w1, (d_in, slm_dim_1), dtype=jnp.float32) / jnp.sqrt(d_in)
    b1 = jax.random.normal(k_b1, (1, slm_dim_1), dtype=jnp.float32) * 0.01
    w2 = jax.random.normal(k_w2, (slm_dim_1, slm_dim_2), dtype=jnp.float32) / jnp.sqrt(slm_dim_1)
    b2 = jax.random.normal(k_b2, (1, slm_dim_2), dtype=jnp.float32) * 0.01

    # 1) f32, auto batch tile (cdiv grid -> 3 steps, last block partial, no pads).
    out = jax.block_until_ready(sample_learning_forward(feat, w1, b1, w2, b2))
    ref = reference_forward(feat, w1, b1, w2, b2)
    assert out.shape == (batch, slm_dim_2)
    assert jnp.allclose(out, ref, atol=1e-4, rtol=1e-4)

    # 2) Forced K-split over D_in (2 clean K steps of 128), f32.
    out_k = jax.block_until_ready(
        sample_learning_forward(feat, w1, b1, w2, b2, d_in_tile=128))
    assert jnp.allclose(out_k, ref, atol=1e-4, rtol=1e-4)

    # 3) K-split with D_in not a multiple of the K tile (exercises in-kernel
    #    masking of the ragged last K block).
    d_in_b = 200
    w1_b = jax.random.normal(k_w1, (d_in_b, slm_dim_1), dtype=jnp.float32) / jnp.sqrt(d_in_b)
    feat_b = jax.random.normal(k_x, (batch, d_in_b), dtype=jnp.float32)
    out_m = jax.block_until_ready(
        sample_learning_forward(feat_b, w1_b, b1, w2, b2, d_in_tile=128))
    ref_m = reference_forward(feat_b, w1_b, b1, w2, b2)
    assert out_m.shape == (batch, slm_dim_2)
    assert jnp.allclose(out_m, ref_m, atol=1e-4, rtol=1e-4)

    # 4) bf16 activations/weights (recommended on v6e/v7x; halves HBM traffic),
    #    f32 MXU accumulation, f32 biases, dtype-aware (16-row) sublane tiling.
    feat_bf = feat.astype(jnp.bfloat16)
    w1_bf = w1.astype(jnp.bfloat16)
    w2_bf = w2.astype(jnp.bfloat16)
    out_bf = jax.block_until_ready(
        sample_learning_forward(feat_bf, w1_bf, b1, w2_bf, b2))
    ref_bf = reference_forward(feat_bf, w1_bf, b1, w2_bf, b2)
    assert out_bf.shape == (batch, slm_dim_2)
    assert jnp.allclose(out_bf.astype(jnp.float32), ref_bf.astype(jnp.float32),
                        atol=3e-2, rtol=3e-2)

    print("KERNEL_OK")
</pallas_src>

<mosaic_0001>
module attributes {stable_mosaic.version = 11 : i64} {
  func.func @_mlp_kernel(%arg0: i32, %arg1: memref<8x256xf32, #tpu.memory_space<vmem>>, %arg2: memref<256x64xf32, #tpu.memory_space<vmem>>, %arg3: memref<1x64xf32, #tpu.memory_space<vmem>>, %arg4: memref<64x32xf32, #tpu.memory_space<vmem>>, %arg5: memref<1x32xf32, #tpu.memory_space<vmem>>, %arg6: memref<8x32xf32, #tpu.memory_space<vmem>>) attributes {dimension_semantics = [#tpu.dimension_semantics<parallel>], iteration_bounds = array<i64: 3>, scalar_prefetch = 0 : i64, scratch_operands = 0 : i64, tpu.core_type = #tpu.core_type<tc>, window_params = [{transform_indices = @transform_0, window_bounds = array<i64: 8, 256>}, {pipeline_mode = #tpu.pipeline_mode<synchronous>, transform_indices = @transform_1, window_bounds = array<i64: 256, 64>}, {pipeline_mode = #tpu.pipeline_mode<synchronous>, transform_indices = @transform_2, window_bounds = array<i64: 1, 64>}, {pipeline_mode = #tpu.pipeline_mode<synchronous>, transform_indices = @transform_3, window_bounds = array<i64: 64, 32>}, {pipeline_mode = #tpu.pipeline_mode<synchronous>, transform_indices = @transform_4, window_bounds = array<i64: 1, 32>}, {transform_indices = @transform_5, window_bounds = array<i64: 8, 32>}]} {
    %c0 = arith.constant 0 : index
    %c0_0 = arith.constant 0 : index
    %0 = vector.load %arg1[%c0, %c0_0] : memref<8x256xf32, #tpu.memory_space<vmem>>, vector<8x256xf32>
    %c0_1 = arith.constant 0 : index
    %c0_2 = arith.constant 0 : index
    %1 = vector.load %arg2[%c0_1, %c0_2] : memref<256x64xf32, #tpu.memory_space<vmem>>, vector<256x64xf32>
    %cst = arith.constant dense<0.000000e+00> : vector<8x64xf32>
    %2 = tpu.matmul %0, %1, %cst {dimension_numbers = #tpu.dot_dimension_numbers<[1], [0], [0], [1], [0, 0, 1, 1], [], []>} : vector<8x256xf32>, vector<256x64xf32>, vector<8x64xf32> -> vector<8x64xf32>
    %c0_3 = arith.constant 0 : index
    %c0_4 = arith.constant 0 : index
    %3 = vector.load %arg3[%c0_3, %c0_4] : memref<1x64xf32, #tpu.memory_space<vmem>>, vector<1x64xf32>
    %4 = vector.broadcast %3 : vector<1x64xf32> to vector<8x64xf32>
    %5 = arith.addf %2, %4 : vector<8x64xf32>
    %cst_5 = arith.constant 0.000000e+00 : f32
    %6 = vector.broadcast %cst_5 : f32 to vector<8x64xf32>
    %7 = arith.maximumf %5, %6 : vector<8x64xf32>
    %c0_6 = arith.constant 0 : index
    %c0_7 = arith.constant 0 : index
    %8 = vector.load %arg4[%c0_6, %c0_7] : memref<64x32xf32, #tpu.memory_space<vmem>>, vector<64x32xf32>
    %cst_8 = arith.constant dense<0.000000e+00> : vector<8x32xf32>
    %9 = tpu.matmul %7, %8, %cst_8 {dimension_numbers = #tpu.dot_dimension_numbers<[1], [0], [0], [1], [0, 0, 1, 1], [], []>} : vector<8x64xf32>, vector<64x32xf32>, vector<8x32xf32> -> vector<8x32xf32>
    %c0_9 = arith.constant 0 : index
    %c0_10 = arith.constant 0 : index
    %10 = vector.load %arg5[%c0_9, %c0_10] : memref<1x32xf32, #tpu.memory_space<vmem>>, vector<1x32xf32>
    %11 = vector.broadcast %10 : vector<1x32xf32> to vector<8x32xf32>
    %12 = arith.addf %9, %11 : vector<8x32xf32>
    %cst_11 = arith.constant 0.000000e+00 : f32
    %13 = vector.broadcast %cst_11 : f32 to vector<8x32xf32>
    %14 = arith.maximumf %12, %13 : vector<8x32xf32>
    %c0_12 = arith.constant 0 : index
    %c0_13 = arith.constant 0 : index
    %15 = vector.load %arg6[%c0_12, %c0_13] : memref<8x32xf32, #tpu.memory_space<vmem>>, vector<8x32xf32>
    tpu.vector_store %arg6[%c0_12, %c0_13], %14 {strides = array<i32>} : memref<8x32xf32, #tpu.memory_space<vmem>>, vector<8x32xf32>,
    return
  }
  func.func @transform_0(%arg0: i32) -> (i32, i32) {
    %c0_i32 = arith.constant 0 : i32
    %c0_i32_0 = arith.constant 0 : i32
    return %arg0, %c0_i32 : i32, i32
  }
  func.func @transform_1(%arg0: i32) -> (i32, i32) {
    %c0_i32 = arith.constant 0 : i32
    %c0_i32_0 = arith.constant 0 : i32
    %c0_i32_1 = arith.constant 0 : i32
    return %c0_i32, %c0_i32_0 : i32, i32
  }
  func.func @transform_2(%arg0: i32) -> (i32, i32) {
    %c0_i32 = arith.constant 0 : i32
    %c0_i32_0 = arith.constant 0 : i32
    %c0_i32_1 = arith.constant 0 : i32
    return %c0_i32, %c0_i32_0 : i32, i32
  }
  func.func @transform_3(%arg0: i32) -> (i32, i32) {
    %c0_i32 = arith.constant 0 : i32
    %c0_i32_0 = arith.constant 0 : i32
    %c0_i32_1 = arith.constant 0 : i32
    return %c0_i32, %c0_i32_0 : i32, i32
  }
  func.func @transform_4(%arg0: i32) -> (i32, i32) {
    %c0_i32 = arith.constant 0 : i32
    %c0_i32_0 = arith.constant 0 : i32
    %c0_i32_1 = arith.constant 0 : i32
    return %c0_i32, %c0_i32_0 : i32, i32
  }
  func.func @transform_5(%arg0: i32) -> (i32, i32) {
    %c0_i32 = arith.constant 0 : i32
    %c0_i32_0 = arith.constant 0 : i32
    return %arg0, %c0_i32 : i32, i32
  }
}

</mosaic_0001>

<llo_original>
// kernel: tpu_custom_call.1
$region0: #{tpu_custom_call.1}
  #allocation0 [shape = 'u32[]', space=smem, size = 0x4, offset = 0x4, fixed_abs, tag = 'smem constant byte address 0x4 - core index']
  #allocation1 [shape = 'u32[144,128]{1,0:T(1,128)}', space=vmem, size = 0x12000, scoped, tag = 'internal scratch']
  %s0 = inlined_call_operand.vmem [shape: f32[20,256], index: 0, kind: input, shape index: {}]
  %s1 = inlined_call_operand.vmem [shape: f32[256,64], index: 1, kind: input, shape index: {}]
  %s2 = inlined_call_operand.vmem [shape: f32[1,64], index: 2, kind: input, shape index: {}]
  %s3 = inlined_call_operand.vmem [shape: f32[64,32], index: 3, kind: input, shape index: {}]
  %s4 = inlined_call_operand.vmem [shape: f32[1,32], index: 4, kind: input, shape index: {}]
  %s5 = inlined_call_operand.hbm [shape: f32[20,32], index: 5, kind: output, shape index: {}]
  %s6 = sld [smem:[#allocation0]]
  $region53: #{tpu_custom_call.1} parent=0
    _
  %s8 = ssub.s32 1, %s6
  %s9 = scalar_select 0, %s8, %s6
  $region1: #{tpu_custom_call.1} parent=0
    #allocation2 [shape = 'u8[8192]{0}', space=vmem, size = 0x2000, scoped, tag = 'output window, operand 0']
    #allocation3 [shape = 's32[2]{0}', space=sflag, size = 0x8, scoped, tag = 'scoped memory for tpu_custom_call.1']
    %10 = vsyncpa [#allocation3], 0
    %s11 = scalar_lea.sflag [#allocation3], 1
    %12 = vsyncpa %s11, 0
    loop: start=0, step=1, limit=5
    $region2: #{tpu_custom_call.1} parent=1 // loop_pre_header
      _
    $region3: #{tpu_custom_call.1} parent=1 // loop_header
      %s14 = sphi 0, %s18
      %p15 = scmp.ge.s32.totalorder %s14, 5
      %s24 = sphi 0, %s26
      %s27 = sphi 0, %s24
      %s28 = sphi 0, %s27
      %s44 = sphi 0, %s28
      %s48 = sphi 0, %s48
      %s50 = sphi 0, %s48
      %s51 = sphi 0, %s50
      %s65 = sphi 0, %s51
      %s69 = sphi 0, %s69
      %s71 = sphi 0, %s69
      %s72 = sphi 0, %s71
      %s86 = sphi 0, %s72
      %s90 = sphi 0, %s90
      %s92 = sphi 0, %s90
      %s93 = sphi 0, %s92
      %s107 = sphi 0, %s93
      %s111 = sphi 0, %s111
      %s113 = sphi 0, %s111
      %s114 = sphi 0, %s113
      %s128 = sphi 0, %s114
      %s134 = sphi 0, %s136
      %s137 = sphi 0, %s134
      %s138 = sphi 0, %s137
      %s154 = sphi 0, %s138
    $region4: #{tpu_custom_call.1} parent=1 // loop_header_branch
      %17 = sbr.rel (%p15) target = $region8
    $region5: #{tpu_custom_call.1} parent=1 // loop_body
      %s19 = ssub.s32 %s14, 1
      %s20 = ssub.s32 %s14, 2
      %s21 = sadd.s32 %s14, 1
      %s22 = ssub.s32 %s14, %s21
      %p23 = scmp.eq.s32.totalorder %s22, 0
      %s25 = sadd.s32 %s24, 1
      %s26 = scalar_select %p23, %s24, %s25
      %p29 = pneg %p23
      %p30 = scmp.eq.s32.totalorder %s14, 2
      %p31 = por %p29, %p30
      %p32 = scmp.ne.s32.totalorder %s24, %s27
      %p33 = scmp.eq.s32.totalorder %s14, 0
      %p34 = por %p32, %p33
      %p35 = scmp.ne.s32.totalorder %s24, %s27
      %p36 = scmp.eq.s32.totalorder %s19, 2
      %p37 = por %p35, %p36
      %p38 = scmp.ne.s32.totalorder %s27, %s28
      %p39 = scmp.eq.s32.totalorder %s19, 0
      %p40 = por %p38, %p39
      %p41 = scmp.ne.s32.totalorder %s27, %s28
      %p42 = scmp.eq.s32.totalorder %s20, 2
      %p43 = por %p41, %p42
      %p45 = scmp.ne.s32.totalorder %s28, %s44
      %p46 = scmp.eq.s32.totalorder %s20, 0
      %p47 = por %p45, %p46
      %s49 = sadd.s32 %s48, 1
      %p52 = scmp.eq.s32.totalorder %s14, 2
      %p53 = scmp.ne.s32.totalorder %s48, %s50
      %p54 = scmp.eq.s32.totalorder %s14, 0
      %p55 = por %p53, %p54
      %p56 = scmp.ne.s32.totalorder %s48, %s50
      %p57 = scmp.eq.s32.totalorder %s19, 2
      %p58 = por %p56, %p57
      %p59 = scmp.ne.s32.totalorder %s50, %s51
      %p60 = scmp.eq.s32.totalorder %s19, 0
      %p61 = por %p59, %p60
      %p62 = scmp.ne.s32.totalorder %s50, %s51
      %p63 = scmp.eq.s32.totalorder %s20, 2
      %p64 = por %p62, %p63
      %p66 = scmp.ne.s32.totalorder %s51, %s65
      %p67 = scmp.eq.s32.totalorder %s20, 0
      %p68 = por %p66, %p67
      %s70 = sadd.s32 %s69, 1
      %p73 = scmp.eq.s32.totalorder %s14, 2
      %p74 = scmp.ne.s32.totalorder %s69, %s71
      %p75 = scmp.eq.s32.totalorder %s14, 0
      %p76 = por %p74, %p75
      %p77 = scmp.ne.s32.totalorder %s69, %s71
      %p78 = scmp.eq.s32.totalorder %s19, 2
      %p79 = por %p77, %p78
      %p80 = scmp.ne.s32.totalorder %s71, %s72
      %p81 = scmp.eq.s32.totalorder %s19, 0
      %p82 = por %p80, %p81
      %p83 = scmp.ne.s32.totalorder %s71, %s72
      %p84 = scmp.eq.s32.totalorder %s20, 2
      %p85 = por %p83, %p84
      %p87 = scmp.ne.s32.totalorder %s72, %s86
      %p88 = scmp.eq.s32.totalorder %s20, 0
      %p89 = por %p87, %p88
      %s91 = sadd.s32 %s90, 1
      %p94 = scmp.eq.s32.totalorder %s14, 2
      %p95 = scmp.ne.s32.totalorder %s90, %s92
      %p96 = scmp.eq.s32.totalorder %s14, 0
      %p97 = por %p95, %p96
      %p98 = scmp.ne.s32.totalorder %s90, %s92
      %p99 = scmp.eq.s32.totalorder %s19, 2
      %p100 = por %p98, %p99
      %p101 = scmp.ne.s32.totalorder %s92, %s93
      %p102 = scmp.eq.s32.totalorder %s19, 0
      %p103 = por %p101, %p102
      %p104 = scmp.ne.s32.totalorder %s92, %s93
      %p105 = scmp.eq.s32.totalorder %s20, 2
      %p106 = por %p104, %p105
      %p108 = scmp.ne.s32.totalorder %s93, %s107
      %p109 = scmp.eq.s32.totalorder %s20, 0
      %p110 = por %p108, %p109
      %s112 = sadd.s32 %s111, 1
      %p115 = scmp.eq.s32.totalorder %s14, 2
      %p116 = scmp.ne.s32.totalorder %s111, %s113
      %p117 = scmp.eq.s32.totalorder %s14, 0
      %p118 = por %p116, %p117
      %p119 = scmp.ne.s32.totalorder %s111, %s113
      %p120 = scmp.eq.s32.totalorder %s19, 2
      %p121 = por %p119, %p120
      %p122 = scmp.ne.s32.totalorder %s113, %s114
      %p123 = scmp.eq.s32.totalorder %s19, 0
      %p124 = por %p122, %p123
      %p125 = scmp.ne.s32.totalorder %s113, %s114
      %p126 = scmp.eq.s32.totalorder %s20, 2
      %p127 = por %p125, %p126
      %p129 = scmp.ne.s32.totalorder %s114, %s128
      %p130 = scmp.eq.s32.totalorder %s20, 0
      %p131 = por %p129, %p130
      %s132 = ssub.s32 %s14, %s21
      %p133 = scmp.eq.s32.totalorder %s132, 0
      %s135 = sadd.s32 %s134, 1
      %s136 = scalar_select %p133, %s134, %s135
      %p139 = pneg %p133
      %p140 = scmp.eq.s32.totalorder %s14, 2
      %p141 = por %p139, %p140
      %p142 = scmp.ne.s32.totalorder %s134, %s137
      %p143 = scmp.eq.s32.totalorder %s14, 0
      %p144 = por %p142, %p143
      %p145 = scmp.ne.s32.totalorder %s134, %s137
      %p146 = scmp.eq.s32.totalorder %s19, 2
      %p147 = por %p145, %p146
      %p148 = scmp.ne.s32.totalorder %s137, %s138
      %p149 = scmp.eq.s32.totalorder %s19, 0
      %p150 = por %p148, %p149
      %p151 = scmp.ne.s32.totalorder %s137, %s138
      %p152 = scmp.eq.s32.totalorder %s20, 2
      %p153 = por %p151, %p152
      %p155 = scmp.ne.s32.totalorder %s138, %s154
      %p156 = scmp.eq.s32.totalorder %s20, 0
      %p157 = por %p155, %p156
      %p158 = scmp.le.s32.totalorder 1, %s14
      %p159 = scmp.lt.s32.totalorder %s14, 4
      %p160 = pnand %p158, %p159
      %p161 = pneg %p160
      // Predicated region
      $region9: #{tpu_custom_call.1} parent=5 // pred_check
        _
      $region10: #{tpu_custom_call.1} parent=5 // pred_check_branch
        %163 = sbr.rel (%p160) target = $region12
      $region11: #{tpu_custom_call.1} parent=5 // pred_region
        %s164 = ssub.s32 %s14, 1
        // Predicated region
        $region13: #{tpu_custom_call.1} parent=11 // pred_check
          %p165 = pneg %p61
        $region14: #{tpu_custom_call.1} parent=11 // pred_check_branch
          %167 = sbr.rel (%p165) target = $region16
        $region15: #{tpu_custom_call.1} parent=11 // pred_region
          _
        $region16: #{tpu_custom_call.1} parent=11 // pred_fallthru
          _
        // Predicated region
        $region17: #{tpu_custom_call.1} parent=11 // pred_check
          %p168 = pneg %p82
        $region18: #{tpu_custom_call.1} parent=11 // pred_check_branch
          %170 = sbr.rel (%p168) target = $region20
        $region19: #{tpu_custom_call.1} parent=11 // pred_region
          _
        $region20: #{tpu_custom_call.1} parent=11 // pred_fallthru
          _
        // Predicated region
        $region21: #{tpu_custom_call.1} parent=11 // pred_check
          %p171 = pneg %p103
        $region22: #{tpu_custom_call.1} parent=11 // pred_check_branch
          %173 = sbr.rel (%p171) target = $region24
        $region23: #{tpu_custom_call.1} parent=11 // pred_region
          _
        $region24: #{tpu_custom_call.1} parent=11 // pred_fallthru
          _
        // Predicated region
        $region25: #{tpu_custom_call.1} parent=11 // pred_check
          %p174 = pneg %p124
        $region26: #{tpu_custom_call.1} parent=11 // pred_check_branch
          %176 = sbr.rel (%p174) target = $region28
        $region27: #{tpu_custom_call.1} parent=11 // pred_region
          _
        $region28: #{tpu_custom_call.1} parent=11 // pred_fallthru
          _
      $region12: #{tpu_custom_call.1} parent=5 // pred_fallthru
        _
      %p177 = scmp.lt.s32.totalorder %s14, 3
      // Predicated region
      $region29: #{tpu_custom_call.1} parent=5 // pred_check
        %p178 = pneg %p177
      $region30: #{tpu_custom_call.1} parent=5 // pred_check_branch
        %180 = sbr.rel (%p178) target = $region32
      $region31: #{tpu_custom_call.1} parent=5 // pred_region
        // Predicated region
        $region33: #{tpu_custom_call.1} parent=31 // pred_check
          %p181 = pneg %p34
        $region34: #{tpu_custom_call.1} parent=31 // pred_check_branch
          %183 = sbr.rel (%p181) target = $region36
        $region35: #{tpu_custom_call.1} parent=31 // pred_region
          %p184 = scmp.lt.s32.totalorder %s14, 2
          %s185 = scalar_select %p184, %s14, 2
          %s186 = smul.addr %s185, 2
          %s187 = smul.addr %s186, 8
          %s188 = scalar_lea.vmem %s0, %s187
        $region36: #{tpu_custom_call.1} parent=31 // pred_fallthru
          _
      $region32: #{tpu_custom_call.1} parent=5 // pred_fallthru
        _
      %p189 = scmp.le.s32.totalorder 1, %s14
      %p190 = scmp.lt.s32.totalorder %s14, 4
      %p191 = pnand %p189, %p190
      %p192 = pneg %p191
      // Predicated region
      $region37: #{tpu_custom_call.1} parent=5 // pred_check
        _
      $region38: #{tpu_custom_call.1} parent=5 // pred_check_branch
        %194 = sbr.rel (%p191) target = $region40
      $region39: #{tpu_custom_call.1} parent=5 // pred_region
        %s195 = ssub.s32 %s14, 1
        %p196 = scmp.lt.s32.totalorder %s19, 2
        %s197 = scalar_select %p196, %s19, 2
        %s198 = smul.addr %s197, 2
        %s199 = smul.addr %s198, 8
        %s200 = scalar_lea.vmem %s0, %s199
        %p201 = pneg %p40
        %p202 = pneg %p37
        %p203 = pneg %p61
        %p204 = pneg %p58
        %p205 = pneg %p82
        %p206 = pneg %p79
        %p207 = pneg %p103
        %p208 = pneg %p100
        %p209 = pneg %p124
        %p210 = pneg %p121
        %p211 = pneg %p150
        %p212 = pneg %p147
        %s213 = sand.u32 %s137, 1
        %s214 = scalar_lea.sflag [#allocation3], %s213
        %s215 = sand.u32 %s137, 1
        %s216 = smul.addr %s215, 8
        %s217 = scalar_lea.vmem [#allocation2], %s216
        %p218 = scmp.lt.s32.totalorder %s19, 2
        %s219 = scalar_select %p218, %s19, 2
        %s220 = smul.addr %s219, 2
        %s221 = smul.addr %s220, 8
        %s222 = scalar_lea.vmem %s0, %s221
        %v223 = vld [vmem:[%s222] sm:$0xff]
        %v224 = vld [vmem:[%s222 + $0x8] sm:$0xff]
        %v225 = vld [vmem:[%s1] sm:$0xff]
        %v226 = vld [vmem:[%s1 + $0x8] sm:$0xff]
        %v227 = vld [vmem:[%s1 + $0x10] sm:$0xff]
        %v228 = vld [vmem:[%s1 + $0x18] sm:$0xff]
        %v229 = vld [vmem:[%s1 + $0x20] sm:$0xff]
        %v230 = vld [vmem:[%s1 + $0x28] sm:$0xff]
        %v231 = vld [vmem:[%s1 + $0x30] sm:$0xff]
        %v232 = vld [vmem:[%s1 + $0x38] sm:$0xff]
        %v233 = vld [vmem:[%s1 + $0x40] sm:$0xff]
        %v234 = vld [vmem:[%s1 + $0x48] sm:$0xff]
        %v235 = vld [vmem:[%s1 + $0x50] sm:$0xff]
        %v236 = vld [vmem:[%s1 + $0x58] sm:$0xff]
        %v237 = vld [vmem:[%s1 + $0x60] sm:$0xff]
        %v238 = vld [vmem:[%s1 + $0x68] sm:$0xff]
        %v239 = vld [vmem:[%s1 + $0x70] sm:$0xff]
        %v240 = vld [vmem:[%s1 + $0x78] sm:$0xff]
        %v241 = vld [vmem:[%s1 + $0x80] sm:$0xff]
        %v242 = vld [vmem:[%s1 + $0x88] sm:$0xff]
        %v243 = vld [vmem:[%s1 + $0x90] sm:$0xff]
        %v244 = vld [vmem:[%s1 + $0x98] sm:$0xff]
        %v245 = vld [vmem:[%s1 + $0xa0] sm:$0xff]
        %v246 = vld [vmem:[%s1 + $0xa8] sm:$0xff]
        %v247 = vld [vmem:[%s1 + $0xb0] sm:$0xff]
        %v248 = vld [vmem:[%s1 + $0xb8] sm:$0xff]
        %v249 = vld [vmem:[%s1 + $0xc0] sm:$0xff]
        %v250 = vld [vmem:[%s1 + $0xc8] sm:$0xff]
        %v251 = vld [vmem:[%s1 + $0xd0] sm:$0xff]
        %v252 = vld [vmem:[%s1 + $0xd8] sm:$0xff]
        %v253 = vld [vmem:[%s1 + $0xe0] sm:$0xff]
        %v254 = vld [vmem:[%s1 + $0xe8] sm:$0xff]
        %v255 = vld [vmem:[%s1 + $0xf0] sm:$0xff]
        %v256 = vld [vmem:[%s1 + $0xf8] sm:$0xff]
        %v257 = vld [vmem:[%s2] sm:$0x1]
        %v259 = vlaneseq
        %v260 = vshrl.u32 %v259, 7
        %v261 = vsub.s32 0, %v260
        %v262 = vrot.slane %v257, %v261
        %264 = vmatprep.subr.mxu0 0.0
        %265 = vmatpush1.msra.mxu0 %v240
        %266 = vmatprep.subr.mxu0 0.0
        %267 = vmatpush1.msra.mxu0 %v239
        %268 = vmatprep.subr.mxu0 0.0
        %269 = vmatpush1.msra.mxu0 %v238
        %270 = vmatprep.subr.mxu0 0.0
        %271 = vmatpush1.msra.mxu0 %v237
        %272 = vmatprep.subr.mxu0 0.0
        %273 = vmatpush1.msra.mxu0 %v236
        %274 = vmatprep.subr.mxu0 0.0
        %275 = vmatpush1.msra.mxu0 %v235
        %276 = vmatprep.subr.mxu0 0.0
        %277 = vmatpush1.msra.mxu0 %v234
        %278 = vmatprep.subr.mxu0 0.0
        %279 = vmatpush1.msra.mxu0 %v233
        %280 = vmatprep.subr.mxu0 0.0
        %281 = vmatpush1.msra.mxu0 %v232
        %282 = vmatprep.subr.mxu0 0.0
        %283 = vmatpush1.msra.mxu0 %v231
        %284 = vmatprep.subr.mxu0 0.0
        %285 = vmatpush1.msra.mxu0 %v230
        %286 = vmatprep.subr.mxu0 0.0
        %287 = vmatpush1.msra.mxu0 %v229
        %288 = vmatprep.subr.mxu0 0.0
        %289 = vmatpush1.msra.mxu0 %v228
        %290 = vmatprep.subr.mxu0 0.0
        %291 = vmatpush1.msra.mxu0 %v227
        %292 = vmatprep.subr.mxu0 0.0
        %293 = vmatpush1.msra.mxu0 %v226
        %294 = vmatprep.subr.mxu0 0.0
        %295 = vmatpush1.msra.mxu0 %v225
        %296 = vmatprep.subr.mxu0 0.0
        %297 = vmatpush2.msra.mxu0 %v256
        %298 = vmatprep.subr.mxu0 0.0
        %299 = vmatpush2.msra.mxu0 %v255
        %300 = vmatprep.subr.mxu0 0.0
        %301 = vmatpush2.msra.mxu0 %v254
        %302 = vmatprep.subr.mxu0 0.0
        %303 = vmatpush2.msra.mxu0 %v253
        %304 = vmatprep.subr.mxu0 0.0
        %305 = vmatpush2.msra.mxu0 %v252
        %306 = vmatprep.subr.mxu0 0.0
        %307 = vmatpush2.msra.mxu0 %v251
        %308 = vmatprep.subr.mxu0 0.0
        %309 = vmatpush2.msra.mxu0 %v250
        %310 = vmatprep.subr.mxu0 0.0
        %311 = vmatpush2.msra.mxu0 %v249
        %312 = vmatprep.subr.mxu0 0.0
        %313 = vmatpush2.msra.mxu0 %v248
        %314 = vmatprep.subr.mxu0 0.0
        %315 = vmatpush2.msra.mxu0 %v247
        %316 = vmatprep.subr.mxu0 0.0
        %317 = vmatpush2.msra.mxu0 %v246
        %318 = vmatprep.subr.mxu0 0.0
        %319 = vmatpush2.msra.mxu0 %v245
        %320 = vmatprep.subr.mxu0 0.0
        %321 = vmatpush2.msra.mxu0 %v244
        %322 = vmatprep.subr.mxu0 0.0
        %323 = vmatpush2.msra.mxu0 %v243
        %324 = vmatprep.subr.mxu0 0.0
        %325 = vmatpush2.msra.mxu0 %v242
        %326 = vmatprep.subr.mxu0 0.0
        %327 = vmatpush2.msra.mxu0 %v241
        %328 = vmatprep.mubr.f32.mxu0 %v224
        %329 = vmatmul.mubr.f32.gmra.mxu0 %v223
        %v330 = vpop.f32.mrf.mxu0
        %v331 = vadd.f32 %v262, %v330
        %v332 = vpop.f32.mrf.mxu0
        %333 = vdwg.mxu0
        %v334 = vmax.f32 %v331, 0.0
        %v335 = vld [vmem:[%s3] sm:$0xff]
        %v336 = vld [vmem:[%s3 + $0x8] sm:$0xff]
        %v337 = vld [vmem:[%s3 + $0x10] sm:$0xff]
        %v338 = vld [vmem:[%s3 + $0x18] sm:$0xff]
        %v339 = vld [vmem:[%s3 + $0x20] sm:$0xff]
        %v340 = vld [vmem:[%s3 + $0x28] sm:$0xff]
        %v341 = vld [vmem:[%s3 + $0x30] sm:$0xff]
        %v342 = vld [vmem:[%s3 + $0x38] sm:$0xff]
        %v343 = vld [vmem:[%s4] sm:$0x1]
        %v345 = vlaneseq
        %v346 = vshrl.u32 %v345, 7
        %v347 = vsub.s32 0, %v346
        %v348 = vrot.slane %v343, %v347
        %vm350 = vcmask 523264
        %v352 = vsel %vm350, %v334, 0
        %354 = vmatprep.subr.mxu0 0.0
        %355 = vmatpush1.msra.mxu0 0.0
        %356 = vmatprep.subr.mxu0 0.0
        %357 = vmatpush1.msra.mxu0 0.0
        %358 = vmatprep.subr.mxu0 0.0
        %359 = vmatpush1.msra.mxu0 0.0
        %360 = vmatprep.subr.mxu0 0.0
        %361 = vmatpush1.msra.mxu0 0.0
        %362 = vmatprep.subr.mxu0 0.0
        %363 = vmatpush1.msra.mxu0 0.0
        %364 = vmatprep.subr.mxu0 0.0
        %365 = vmatpush1.msra.mxu0 0.0
        %366 = vmatprep.subr.mxu0 0.0
        %367 = vmatpush1.msra.mxu0 0.0
        %368 = vmatprep.subr.mxu0 0.0
        %369 = vmatpush1.msra.mxu0 0.0
        %370 = vmatprep.subr.mxu0 0.0
        %371 = vmatpush1.msra.mxu0 %v342
        %372 = vmatprep.subr.mxu0 0.0
        %373 = vmatpush1.msra.mxu0 %v341
        %374 = vmatprep.subr.mxu0 0.0
        %375 = vmatpush1.msra.mxu0 %v340
        %376 = vmatprep.subr.mxu0 0.0
        %377 = vmatpush1.msra.mxu0 %v339
        %378 = vmatprep.subr.mxu0 0.0
        %379 = vmatpush1.msra.mxu0 %v338
        %380 = vmatprep.subr.mxu0 0.0
        %381 = vmatpush1.msra.mxu0 %v337
        %382 = vmatprep.subr.mxu0 0.0
        %383 = vmatpush1.msra.mxu0 %v336
        %384 = vmatprep.subr.mxu0 0.0
        %385 = vmatpush1.msra.mxu0 %v335
        %386 = vmatprep.subr.mxu0 0.0
        %387 = vmatpush2.msra.mxu0 0.0
        %388 = vmatprep.subr.mxu0 0.0
        %389 = vmatpush2.msra.mxu0 0.0
        %390 = vmatprep.subr.mxu0 0.0
        %391 = vmatpush2.msra.mxu0 0.0
        %392 = vmatprep.subr.mxu0 0.0
        %393 = vmatpush2.msra.mxu0 0.0
        %394 = vmatprep.subr.mxu0 0.0
        %395 = vmatpush2.msra.mxu0 0.0
        %396 = vmatprep.subr.mxu0 0.0
        %397 = vmatpush2.msra.mxu0 0.0
        %398 = vmatprep.subr.mxu0 0.0
        %399 = vmatpush2.msra.mxu0 0.0
        %400 = vmatprep.subr.mxu0 0.0
        %401 = vmatpush2.msra.mxu0 0.0
        %402 = vmatprep.subr.mxu0 0.0
        %403 = vmatpush2.msra.mxu0 0.0
        %404 = vmatprep.subr.mxu0 0.0
        %405 = vmatpush2.msra.mxu0 0.0
        %406 = vmatprep.subr.mxu0 0.0
        %407 = vmatpush2.msra.mxu0 0.0
        %408 = vmatprep.subr.mxu0 0.0
        %409 = vmatpush2.msra.mxu0 0.0
        %410 = vmatprep.subr.mxu0 0.0
        %411 = vmatpush2.msra.mxu0 0.0
        %412 = vmatprep.subr.mxu0 0.0
        %413 = vmatpush2.msra.mxu0 0.0
        %414 = vmatprep.subr.mxu0 0.0
        %415 = vmatpush2.msra.mxu0 0.0
        %416 = vmatprep.subr.mxu0 0.0
        %417 = vmatpush2.msra.mxu0 0.0
        %418 = vmatprep.mubr.f32.mxu0 0.0
        %419 = vmatmul.mubr.f32.gmra.mxu0 %v352
        %v420 = vpop.f32.mrf.mxu0
        %v421 = vadd.f32 %v348, %v420
        %v422 = vpop.f32.mrf.mxu0
        %423 = vdwg.mxu0
        %v424 = vmax.f32 %v421, 0.0
        %vm425 = vcmask 261120
        %426 = vst.msk [vmem:[%s217] sm:$0xff] %vm425, %v424
        %s427 = sand.u32 %s137, 1
        %s428 = scalar_lea.sflag [#allocation3], %s427
        %s429 = sand.u32 %s137, 1
        %s430 = smul.addr %s429, 8
        %s431 = scalar_lea.vmem [#allocation2], %s430
        // Predicated region
        $region41: #{tpu_custom_call.1} parent=39 // pred_check
          %p432 = pneg %p147
        $region42: #{tpu_custom_call.1} parent=39 // pred_check_branch
          %434 = sbr.rel (%p432) target = $region44
        $region43: #{tpu_custom_call.1} parent=39 // pred_region
          %s436 = ssub.s32 128, 128
          %437 = vsyncadd %s428, %s436
          %s438 = smul.addr %s19, 128
          %s439 = scalar_lea.hbm %s5, %s438
          %s441 = sshll.u32 %s431, 4
          %s442 = int_to_ptr.vmem [resolvable:$true] %s441
          %444 = dma.vmem_to_hbm [thread:$0]  %s442, 128, %s439, %s428
        $region44: #{tpu_custom_call.1} parent=39 // pred_fallthru
          _
      $region40: #{tpu_custom_call.1} parent=5 // pred_fallthru
        _
      %p445 = scmp.le.s32.totalorder 2, %s14
      // Predicated region
      $region45: #{tpu_custom_call.1} parent=5 // pred_check
        %p446 = pneg %p445
      $region46: #{tpu_custom_call.1} parent=5 // pred_check_branch
        %448 = sbr.rel (%p446) target = $region48
      $region47: #{tpu_custom_call.1} parent=5 // pred_region
        %s449 = ssub.s32 %s14, 2
        // Predicated region
        $region49: #{tpu_custom_call.1} parent=47 // pred_check
          %p450 = pneg %p153
        $region50: #{tpu_custom_call.1} parent=47 // pred_check_branch
          %452 = sbr.rel (%p450) target = $region52
        $region51: #{tpu_custom_call.1} parent=47 // pred_region
          %s453 = sand.u32 %s138, 1
          %s454 = scalar_lea.sflag [#allocation3], %s453
          %s455 = sand.u32 %s138, 1
          %s456 = smul.addr %s455, 8
          %s457 = scalar_lea.vmem [#allocation2], %s456
          %458 = dma.done %s454, 128
        $region52: #{tpu_custom_call.1} parent=47 // pred_fallthru
          _
      $region48: #{tpu_custom_call.1} parent=5 // pred_fallthru
        _
    $region6: #{tpu_custom_call.1} parent=1 // loop_footer
      %s18 = sadd.s32 1, %s14
    $region7: #{tpu_custom_call.1} parent=1 // loop_footer_branch
      %13 = sbr.rel target = $region3
    $region8: #{tpu_custom_call.1} parent=1 // loop_exit
      _
    %459 = vsyncpa [#allocation3], 1
    %s460 = scalar_lea.sflag [#allocation3], 1
    %461 = vsyncpa %s460, 1

</llo_original>
